<compile_context>
chip_gen: v7x
topology: tpu7x:2x2x1
jax: 0.10.0
libtpu: 0.0.40
codegen_flags: <defaults>
</compile_context>

<pallas_src>
import functools

import jax
import jax.numpy as jnp
from jax.experimental import pallas as pl
from jax.experimental.pallas import tpu as pltpu


def _rup(n, m):
    return ((n + m - 1) // m) * m


def _pad_to(x, shape):
    pads = [(0, t - s) for s, t in zip(x.shape, shape)]
    return jnp.pad(x, pads)


# ----------------------------------------------------------------------------
# One-time probe: which rotation convention does pltpu.roll use?
# (numpy convention: out[i] = in[(i - shift) % n]).  The gate-extraction shifts
# are derived from the probed convention, so they are correct either way.
# Runs eagerly (outside jit) during parameter preparation.
# ----------------------------------------------------------------------------
@functools.lru_cache(maxsize=None)
def _roll_uses_numpy_convention():
    def probe_kernel(x_ref, o_ref):
        o_ref[...] = pltpu.roll(x_ref[...], 1, axis=1)

    x = jnp.broadcast_to(jnp.arange(128, dtype=jnp.float32), (8, 128))
    y = pl.pallas_call(
        probe_kernel, out_shape=jax.ShapeDtypeStruct((8, 128), jnp.float32))(x)
    return bool(y[0, 0] == 127.0)   # numpy convention wraps lane 127 to lane 0


def _gate_shift(offset, width):
    """Static roll amount that brings input lane `offset` to output lane 0."""
    if _roll_uses_numpy_convention():
        return (width - offset) % width
    return offset % width


# ----------------------------------------------------------------------------
# Fused kernel: one launch, the whole T-1 step recurrence unrolled inside.
# ----------------------------------------------------------------------------
def _dynamics_fused_kernel(
        po_in_ref, pr_in_ref, dy_in_ref,
        po_whh, po_hw, po_hb,
        pr_whh, pr_hw, pr_hb,
        dy_wz, dy_whh, dy_wmu, dy_bmu,
        pred_ref, kld_ref,
        *, hidden, hidden_pad, gate_pad, latent_pad, batch, steps, gate_shifts):
    Hp, G, Lp = hidden_pad, gate_pad, latent_pad
    Bp = pred_ref.shape[1]
    s_f, s_g, s_o = gate_shifts

    def mm(a, b):
        return jnp.dot(a, b, preferred_element_type=jnp.float32)

    # Time-invariant lane/row masks, hoisted out of the unrolled loop.
    lane = jax.lax.broadcasted_iota(jnp.int32, (Bp, G), 1)
    g_lanes = (lane >= 2 * hidden) & (lane < 3 * hidden)     # the tanh ("g") gate
    hid_mask = lane[:, :Hp] < hidden                         # real hidden lanes
    row_mask = jax.lax.broadcasted_iota(jnp.int32, (Bp, Lp), 0) < batch

    def lstm(gates, c_prev):
        # Gates packed [i|f|g|o] in one G-wide slab; separation via XLU rolls.
        act = jnp.where(g_lanes, jnp.tanh(gates), jax.nn.sigmoid(gates))
        i_g = act[:, :Hp]
        f_g = pltpu.roll(act, s_f, axis=1)[:, :Hp]
        g_g = pltpu.roll(act, s_g, axis=1)[:, :Hp]
        o_g = pltpu.roll(act, s_o, axis=1)[:, :Hp]
        c_new = jnp.where(hid_mask, f_g * c_prev + i_g * g_g, 0.0)
        h_new = jnp.where(hid_mask, o_g * jnp.tanh(c_new), 0.0)
        return h_new, c_new

    zeros = jnp.zeros((Bp, Hp), jnp.float32)
    h_po, c_po = zeros, zeros
    h_pr, c_pr = zeros, zeros
    h_dy, c_dy = zeros, zeros

    # T-1 is small: unroll statically -> static indices, maximum overlap.
    # TODO(synk): for long sequences re-introduce an ("arbitrary",) time grid.
    for t in range(steps):
        # ---- posterior cell + fused (mu|logvar) head -> z --------------------
        h_po, c_po = lstm(po_in_ref[t] + mm(h_po, po_whh[...]), c_po)
        head = mm(h_po, po_hw[...]) + po_hb[...]
        mu, logvar = head[:, :Lp], head[:, Lp:]
        z_t = mu   # TODO(synk): z = mu + exp(0.5*logvar)*eps with eps fixed to 0.

        # ---- prior cell + fused head -----------------------------------------
        h_pr, c_pr = lstm(pr_in_ref[t] + mm(h_pr, pr_whh[...]), c_pr)
        phead = mm(h_pr, pr_hw[...]) + pr_hb[...]
        prior_mu, prior_logvar = phead[:, :Lp], phead[:, Lp:]

        # ---- dynamics cell on cat(k_t, action, z); k/a parts precomputed -----
        h_dy, c_dy = lstm(
            dy_in_ref[t] + mm(z_t, dy_wz[...]) + mm(h_dy, dy_whh[...]), c_dy)
        pred_ref[t] = jnp.tanh(mm(h_dy, dy_wmu[...]) + dy_bmu[...])

        # ---- per-step KLD, batch-reduced (lane sum finished in the wrapper) --
        kld = 0.5 * (-1.0 + prior_logvar - logvar + jnp.exp(logvar - prior_logvar)
                     + jnp.square(mu - prior_mu) * jnp.exp(-prior_logvar))
        kld = jnp.where(row_mask, kld, 0.0)      # padded latent lanes are exact 0
        kld_ref[pl.ds(t, 1), :] = jnp.sum(kld, axis=0, keepdims=True)


# ----------------------------------------------------------------------------
# Parameters: logical (PyTorch-like) init + one-time packing/padding.
# ----------------------------------------------------------------------------
def init_cell_params(key, in_dim, hidden, out_dim):
    k0, k1, k2, k3 = jax.random.split(key, 4)
    s_in = 1.0 / jnp.sqrt(jnp.float32(in_dim))
    s_h = 1.0 / jnp.sqrt(jnp.float32(hidden))
    return {
        "w_ih": jax.random.normal(k0, (in_dim, 4 * hidden), jnp.float32) * s_in,
        "w_hh": jax.random.normal(k1, (hidden, 4 * hidden), jnp.float32) * s_h,
        "b":    jnp.zeros((1, 4 * hidden), jnp.float32),   # = b_ih + b_hh
        "w_mu": jax.random.normal(k2, (hidden, out_dim), jnp.float32) * s_h,
        "b_mu": jnp.zeros((1, out_dim), jnp.float32),
        "w_lv": jax.random.normal(k3, (hidden, out_dim), jnp.float32) * s_h,
        "b_lv": jnp.zeros((1, out_dim), jnp.float32),
    }


def prepare_params(raw, kp_dim, action_dim, latent_dim, hidden):
    """One-time padding/packing of the logical weights. Runs eagerly (not jitted)."""
    Hp = _rup(hidden, 128)
    Dp = _rup(kp_dim, 128)
    Ap = _rup(action_dim, 128)
    Lp = _rup(latent_dim, 128)
    G = _rup(4 * hidden, 128)        # packed gate width: [i|f|g|o] contiguous

    def pad_cell(c, in_pad, out_pad):
        head_w = jnp.concatenate(
            [_pad_to(c["w_mu"], (hidden, out_pad)),
             _pad_to(c["w_lv"], (hidden, out_pad))], axis=1)
        head_b = jnp.concatenate(
            [_pad_to(c["b_mu"], (1, out_pad)),
             _pad_to(c["b_lv"], (1, out_pad))], axis=1)
        return {
            "w_ih":   _pad_to(c["w_ih"], (in_pad, G)),
            "w_hh":   _pad_to(c["w_hh"], (Hp, G)),
            "b":      _pad_to(c["b"], (1, G)),
            "head_w": _pad_to(head_w, (Hp, 2 * out_pad)),
            "head_b": head_b,
        }

    po = pad_cell(raw["posterior"], Dp, Lp)
    pr = pad_cell(raw["prior"], Dp, Lp)

    dyn = raw["dynamics"]                       # input = cat(k, action, z)
    w_k = dyn["w_ih"][:kp_dim]
    w_a = dyn["w_ih"][kp_dim:kp_dim + action_dim]
    w_z = dyn["w_ih"][kp_dim + action_dim:]
    dy = {
        "w_k":  _pad_to(w_k, (Dp, G)),
        "w_a":  _pad_to(w_a, (Ap, G)),
        "w_z":  _pad_to(w_z, (Lp, G)),
        "w_hh": _pad_to(dyn["w_hh"], (Hp, G)),
        "b":    _pad_to(dyn["b"], (1, G)),
        "w_mu": _pad_to(dyn["w_mu"], (Hp, Dp)),
        "b_mu": _pad_to(dyn["b_mu"], (1, Dp)),
    }

    gate_shifts = tuple(_gate_shift(k * hidden, G) for k in (1, 2, 3))
    dims = dict(kp=kp_dim, action=action_dim, latent=latent_dim, hidden=hidden,
                kp_pad=Dp, action_pad=Ap, latent_pad=Lp, hidden_pad=Hp,
                gate_pad=G, gate_shifts=gate_shifts)
    return {"posterior": po, "prior": pr, "dynamics": dy, "dims": dims}


# ----------------------------------------------------------------------------
# Dynamics.forward
# ----------------------------------------------------------------------------
def dynamics_forward(params, keypoints, actions):
    """keypoints: (B, T, num_kp, kp_dim), actions: (B, T-1, A) ->
       (keypoint_preds (B, T-1, num_kp*kp_dim), klds (T-1,))."""
    dims = params["dims"]
    B, T = keypoints.shape[:2]
    steps = T - 1
    D = dims["kp"]
    Dp, Ap, Lp = dims["kp_pad"], dims["action_pad"], dims["latent_pad"]
    Hp, G = dims["hidden_pad"], dims["gate_pad"]
    Bp = max(_rup(B, 8), 8)

    kp = keypoints.reshape(B, T, -1)                         # .view(shape[:2] + (-1,))
    kp_tm = _pad_to(jnp.transpose(kp, (1, 0, 2)), (T, Bp, Dp))        # (T, Bp, Dp)
    act_tm = _pad_to(jnp.transpose(actions, (1, 0, 2)), (steps, Bp, Ap))

    po, pr, dy = params["posterior"], params["prior"], params["dynamics"]

    # --- hoisted, time-invariant input projections (one batched GEMM each) ----
    hi = jax.lax.Precision.HIGHEST
    kp_post = kp_tm[1:]          # keypoints[:, t]     -> posterior ("k_t_1")
    kp_prior = kp_tm[:-1]        # keypoints[:, t - 1] -> prior / dynamics ("k_t")
    po_in = jnp.einsum("tbd,dg->tbg", kp_post, po["w_ih"], precision=hi) + po["b"]
    pr_in = jnp.einsum("tbd,dg->tbg", kp_prior, pr["w_ih"], precision=hi) + pr["b"]
    dy_in = (jnp.einsum("tbd,dg->tbg", kp_prior, dy["w_k"], precision=hi)
             + jnp.einsum("tba,ag->tbg", act_tm, dy["w_a"], precision=hi)
             + dy["b"])

    inputs = (po_in, pr_in, dy_in,
              po["w_hh"], po["head_w"], po["head_b"],
              pr["w_hh"], pr["head_w"], pr["head_b"],
              dy["w_z"], dy["w_hh"], dy["w_mu"], dy["b_mu"])

    def full_block(shape):
        nd = len(shape)
        return pl.BlockSpec(shape, lambda i, _nd=nd: (0,) * _nd)

    kernel = functools.partial(
        _dynamics_fused_kernel,
        hidden=dims["hidden"], hidden_pad=Hp, gate_pad=G, latent_pad=Lp,
        batch=B, steps=steps, gate_shifts=dims["gate_shifts"])

    pred_pad, kld_part = pl.pallas_call(
        kernel,
        grid=(1,),
        in_specs=[full_block(a.shape) for a in inputs],
        out_specs=(full_block((steps, Bp, Dp)), full_block((steps, Lp))),
        out_shape=(jax.ShapeDtypeStruct((steps, Bp, Dp), jnp.float32),
                   jax.ShapeDtypeStruct((steps, Lp), jnp.float32)),
        compiler_params=pltpu.CompilerParams(dimension_semantics=("arbitrary",)),
    )(*inputs)

    keypoint_preds = jnp.transpose(pred_pad[:, :B, :D], (1, 0, 2))   # (B, T-1, D)
    klds = jnp.sum(kld_part, axis=1) * (1.0 / float(B * dims["latent"]))
    return keypoint_preds, klds


# ----------------------------------------------------------------------------
# Pure-JAX reference (for a correctness check)
# ----------------------------------------------------------------------------
def _reference_forward(raw, keypoints, actions, hidden):
    B, T = keypoints.shape[:2]
    kp = keypoints.reshape(B, T, -1)

    def cell(p, x, state):
        h, c = state
        g = x @ p["w_ih"] + h @ p["w_hh"] + p["b"]
        i = jax.nn.sigmoid(g[:, :hidden])
        f = jax.nn.sigmoid(g[:, hidden:2 * hidden])
        gg = jnp.tanh(g[:, 2 * hidden:3 * hidden])
        o = jax.nn.sigmoid(g[:, 3 * hidden:])
        c = f * c + i * gg
        h = o * jnp.tanh(c)
        return (h, c), h @ p["w_mu"] + p["b_mu"], h @ p["w_lv"] + p["b_lv"]

    zeros = lambda: (jnp.zeros((B, hidden), jnp.float32),
                     jnp.zeros((B, hidden), jnp.float32))
    po_s, pr_s, dy_s = zeros(), zeros(), zeros()
    preds, klds = [], []
    for t in range(1, T):
        k_t, k_t_1 = kp[:, t - 1], kp[:, t]
        po_s, mu, lv = cell(raw["posterior"], k_t_1, po_s)
        z = mu
        pr_s, pmu, plv = cell(raw["prior"], k_t, pr_s)
        inp = jnp.concatenate([k_t, actions[:, t - 1], z], axis=-1)
        dy_s, dmu, _ = cell(raw["dynamics"], inp, dy_s)
        preds.append(jnp.tanh(dmu))
        kld = 0.5 * (-1.0 + plv - lv + jnp.exp(lv - plv)
                     + jnp.square(mu - pmu) * jnp.exp(-plv))
        klds.append(jnp.mean(kld))
    return jnp.stack(preds, 1), jnp.stack(klds)


# ----------------------------------------------------------------------------
# main
# ----------------------------------------------------------------------------
if __name__ == "__main__":
    B, T, NUM_KP, KP_DIM = 2, 8, 4, 3          # keypoints (B, T, 4, 3) -> flat dim 12
    ACTION_DIM, LATENT_DIM, HIDDEN = 4, 8, 32
    KP_FLAT = NUM_KP * KP_DIM

    root = jax.random.PRNGKey(0)
    k_params, k_kp, k_act = jax.random.split(root, 3)
    kp_key, pr_key, dy_key = jax.random.split(k_params, 3)

    raw = {
        "posterior": init_cell_params(kp_key, KP_FLAT, HIDDEN, LATENT_DIM),
        "prior":     init_cell_params(pr_key, KP_FLAT, HIDDEN, LATENT_DIM),
        "dynamics":  init_cell_params(dy_key, KP_FLAT + ACTION_DIM + LATENT_DIM,
                                      HIDDEN, KP_FLAT),
    }
    params = prepare_params(raw, KP_FLAT, ACTION_DIM, LATENT_DIM, HIDDEN)

    keypoints = jax.random.normal(k_kp, (B, T, NUM_KP, KP_DIM), jnp.float32)
    actions = jax.random.normal(k_act, (B, T - 1, ACTION_DIM), jnp.float32)

    fwd = jax.jit(functools.partial(dynamics_forward, params))
    preds, klds = fwd(keypoints, actions)
    jax.block_until_ready((preds, klds))

    assert preds.shape == (B, T - 1, KP_FLAT), preds.shape
    assert klds.shape == (T - 1,), klds.shape
    assert bool(jnp.all(jnp.isfinite(preds))) and bool(jnp.all(jnp.isfinite(klds)))

    with jax.default_matmul_precision("highest"):
        ref_preds, ref_klds = _reference_forward(raw, keypoints, actions, HIDDEN)

    def close(a, b, tol=2e-3):
        return bool(jnp.all(jnp.abs(a - b) <= tol + tol * jnp.abs(b)))

    assert close(preds, ref_preds), float(jnp.max(jnp.abs(preds - ref_preds)))
    assert close(klds, ref_klds), float(jnp.max(jnp.abs(klds - ref_klds)))

    print("KERNEL_OK")
</pallas_src>

<mosaic_0001>
module attributes {stable_mosaic.version = 11 : i64} {
  func.func @probe_kernel(%arg0: memref<8x128xf32, #tpu.memory_space<vmem>>, %arg1: memref<8x128xf32, #tpu.memory_space<vmem>>) attributes {dimension_semantics = [], scalar_prefetch = 0 : i64, scratch_operands = 0 : i64, tpu.core_type = #tpu.core_type<tc>} {
    %c0 = arith.constant 0 : index
    %c0_0 = arith.constant 0 : index
    %0 = vector.load %arg0[%c0, %c0_0] : memref<8x128xf32, #tpu.memory_space<vmem>>, vector<8x128xf32>
    %c1_i32 = arith.constant 1 : i32
    %1 = tpu.dynamic_rotate %0 by %c1_i32 dim 1 : vector<8x128xf32>, i32 -> vector<8x128xf32>
    %c0_1 = arith.constant 0 : index
    %c0_2 = arith.constant 0 : index
    %2 = vector.load %arg1[%c0_1, %c0_2] : memref<8x128xf32, #tpu.memory_space<vmem>>, vector<8x128xf32>
    tpu.vector_store %arg1[%c0_1, %c0_2], %1 {strides = array<i32>} : memref<8x128xf32, #tpu.memory_space<vmem>>, vector<8x128xf32>,
    return
  }
}

</mosaic_0001>

<llo_original>
// kernel: tpu_custom_call.1
$region0: #{tpu_custom_call.1}
  #allocation0 [shape = 'u32[]', space=smem, size = 0x4, offset = 0x4, fixed_abs, tag = 'smem constant byte address 0x4 - core index']
  #allocation1 [shape = 'u32[144,128]{1,0:T(1,128)}', space=vmem, size = 0x12000, scoped, tag = 'internal scratch']
  %s0 = inlined_call_operand.hbm [shape: f32[8,128], index: 0, kind: input, shape index: {}]
  %s1 = inlined_call_operand.hbm [shape: f32[8,128], index: 1, kind: output, shape index: {}]
  %s2 = sld [smem:[#allocation0]]
  $region18: #{tpu_custom_call.1} parent=0
    _
  %s4 = ssub.s32 1, %s2
  %s5 = scalar_select 0, %s4, %s2
  $region1: #{tpu_custom_call.1} parent=0
    #allocation2 [shape = 'u8[4096]{0}', space=vmem, size = 0x1000, scoped, tag = 'input window, operand 0, single buffered']
    #allocation3 [shape = 's32[1]{0}', space=sflag, size = 0x4, scoped, tag = 'scoped memory for tpu_custom_call.1']
    #allocation4 [shape = 's32[1]{0}', space=sflag, size = 0x4, scoped, tag = 'scoped memory for tpu_custom_call.1']
    #allocation5 [shape = 'u8[4096]{0}', space=vmem, size = 0x1000, scoped, tag = 'output window, operand 0, single buffered']
    %6 = vsyncpa [#allocation3], 0
    %7 = vsyncpa [#allocation4], 0
    // Predicated region
    $region2: #{tpu_custom_call.1} parent=1 // pred_check
      _
    $region3: #{tpu_custom_call.1} parent=1 // pred_check_branch
      %9 = sbr.rel (0) target = $region5
    $region4: #{tpu_custom_call.1} parent=1 // pred_region
      %s11 = ssub.s32 128, 128
      %12 = vsyncadd [#allocation3], %s11
      %s14 = sshll.u32 [#allocation2], 4
      %s15 = int_to_ptr.vmem [resolvable:$true] %s14
      %17 = dma.hbm_to_vmem [thread:$0]  %s0, 128, %s15, [#allocation3]
    $region5: #{tpu_custom_call.1} parent=1 // pred_fallthru
      _
    // Predicated region
    $region6: #{tpu_custom_call.1} parent=1 // pred_check
      _
    $region7: #{tpu_custom_call.1} parent=1 // pred_check_branch
      %19 = sbr.rel (0) target = $region9
    $region8: #{tpu_custom_call.1} parent=1 // pred_region
      %20 = dma.done [#allocation3], 128
    $region9: #{tpu_custom_call.1} parent=1 // pred_fallthru
      _
    %v21 = vld [vmem:[#allocation2] sm:$0xff]
    %22 = vrot.lane.b32.xlu0 %v21, 1
    %v23 = vpop.permute.xlu0 %22
    %24 = vst [vmem:[#allocation5] sm:$0xff] %v23
    // Predicated region
    $region10: #{tpu_custom_call.1} parent=1 // pred_check
      _
    $region11: #{tpu_custom_call.1} parent=1 // pred_check_branch
      %26 = sbr.rel (0) target = $region13
    $region12: #{tpu_custom_call.1} parent=1 // pred_region
      %s28 = ssub.s32 128, 128
      %29 = vsyncadd [#allocation4], %s28
      %s31 = sshll.u32 [#allocation5], 4
      %s32 = int_to_ptr.vmem [resolvable:$true] %s31
      %34 = dma.vmem_to_hbm [thread:$0]  %s32, 128, %s1, [#allocation4]
    $region13: #{tpu_custom_call.1} parent=1 // pred_fallthru
      _
    // Predicated region
    $region14: #{tpu_custom_call.1} parent=1 // pred_check
      _
    $region15: #{tpu_custom_call.1} parent=1 // pred_check_branch
      %36 = sbr.rel (0) target = $region17
    $region16: #{tpu_custom_call.1} parent=1 // pred_region
      %37 = dma.done [#allocation4], 128
    $region17: #{tpu_custom_call.1} parent=1 // pred_fallthru
      _
    %38 = vsyncpa [#allocation3], 1
    %39 = vsyncpa [#allocation4], 1

</llo_original>
